<compile_context>
chip_gen: v5e
topology: v5e:2x2
jax: 0.10.0
libtpu: 0.0.40
codegen_flags: <defaults>
</compile_context>

<pallas_src>
import jax
import jax.numpy as jnp
from jax.experimental import pallas as pl
from jax.experimental.pallas import tpu as pltpu


def _round_up(x, m):
    return (x + m - 1) // m * m


def _cnn_kernel(x_ref, w_ref, o_ref):
    """One MXU matmul per tile: K = W*D contraction (im2col built in VMEM).

    x_ref: (tn, S_out + W - 1, D)  bf16 zero-padded input tile
    w_ref: (W*D, To)               bf16 weights, (w, d)-major rows, resident
    o_ref: (tn, S_out, To)         output tile (lane-dense: To % 128 == 0)
    """
    tn, s_pad, d = x_ref.shape
    kd, to = w_ref.shape
    wsize = kd // d
    s = s_pad - (wsize - 1)

    # Build the (tn*S, W*D) im2col LHS once from the resident VMEM tile (a
    # single relayout pass) instead of W separate K=D matmuls with repeated
    # f32 accumulator read/modify/write traffic.
    xcat = jnp.concatenate([x_ref[:, w:w + s, :] for w in range(wsize)],
                           axis=-1)                       # (tn, s, W*D)
    acc = jnp.dot(xcat.reshape(tn * s, kd), w_ref[...],
                  preferred_element_type=jnp.float32)     # f32 accumulation

    # TODO(synk): if the EUP ever becomes the hot slot on v6e/v7x, cast acc to
    # bf16 before tanh; kept in f32 so the same kernel is also optimal on v5e.
    o_ref[...] = jnp.tanh(acc).astype(o_ref.dtype).reshape(tn, s, to)


def cnn_forward(x, weight, x_mask=None, *, tn=None, out_dtype=None,
                interpret=False):
    """Pallas TPU forward of the sdnet CNN layer.

    x:      (N, S, D) float array.
    weight: (O, W, D) conv weight; W must be odd.
    x_mask: ignored (kept for parity with the PyTorch forward signature).
    Returns (N, S, O) = tanh(conv(x)) in (item, subitem, channel) layout.
    """
    del x_mask  # unused, exactly as in the PyTorch module
    N, S, D = x.shape
    O, W, D2 = weight.shape
    if D2 != D:
        raise ValueError("weight input_size mismatch")
    if W % 2 != 1:
        raise ValueError("window size must be an odd number")
    if out_dtype is None:
        out_dtype = x.dtype

    pad = (W - 1) // 2
    # Output subitem axis -> multiple of 8 (sublane) so in-kernel reshapes are
    # layout-preserving; channel axis -> multiple of 128 (lane-dense stores).
    S_out = _round_up(S, 8)
    S_in = S_out + W - 1                     # 'same' conv pad + sublane pad
    O_pad = _round_up(O, 128)

    # Channel tiling: one block for small O; 256-wide tiles (full MXU result
    # width on v6e/v7x) with a second "parallel" grid axis for large O.
    if O_pad <= 512:
        To = O_pad
    else:
        To = 256
        O_pad = _round_up(O_pad, To)

    # bf16 inputs: half the HBM traffic / input VMEM, native MXU path on all
    # generations; accumulation stays f32 via preferred_element_type.
    in_dtype = jnp.bfloat16
    x_p = jnp.pad(x, ((0, 0), (pad, pad + (S_out - S)), (0, 0))).astype(in_dtype)
    w_2d = jnp.pad(jnp.transpose(weight, (1, 2, 0)),       # (W, D, O)
                   ((0, 0), (0, 0), (0, O_pad - O))
                   ).reshape(W * D, O_pad).astype(in_dtype)

    in_bytes = jnp.dtype(in_dtype).itemsize
    out_bytes = jnp.dtype(out_dtype).itemsize
    # VMEM per item per grid step: double-buffered input + output tiles, the
    # im2col temporary, and the f32 matmul-accumulator / tanh temporaries.
    per_item = (2 * S_in * D * in_bytes            # double-buffered input tile
                + S_out * W * D * in_bytes         # im2col temporary
                + 2 * S_out * To * out_bytes       # double-buffered output tile
                + 2 * S_out * To * 4)              # f32 acc + tanh/cast temp
    if tn is None:
        # ~6 MiB item tiles are already near the HBM roofline; keep >= ~8 grid
        # steps so the DMA pipeline stays overlapped and v7x's two TensorCores
        # both get work.
        tn = max(1, (6 << 20) // max(per_item, 1))
        tn = min(tn, max(1, (N + 7) // 8))
    tn = int(max(1, min(tn, N)))

    grid = (pl.cdiv(N, tn), O_pad // To)   # ragged N tail: OOB reads benign,
                                           # OOB output writes masked.

    # Scoped-VMEM limit: what this launch needs, capped at 75% of the chip's
    # VMEM (48 MiB on v7x's 64 MiB, comfortably under v5e/v6e's 128 MiB).
    try:
        vmem_cap = int(pltpu.get_tpu_info().vmem_capacity_bytes)
    except Exception:  # pragma: no cover - conservative fallback
        vmem_cap = 64 << 20
    w_bytes = 2 * W * D * To * in_bytes
    vmem_limit = int(min(max(tn * per_item + w_bytes + (2 << 20), 16 << 20),
                         (vmem_cap * 3) // 4))

    out = pl.pallas_call(
        _cnn_kernel,
        out_shape=jax.ShapeDtypeStruct((N, S_out, O_pad), out_dtype),
        grid_spec=pltpu.PrefetchScalarGridSpec(
            num_scalar_prefetch=0,
            grid=grid,
            in_specs=[
                pl.BlockSpec((tn, S_in, D), lambda i, j: (i, 0, 0)),
                pl.BlockSpec((W * D, To), lambda i, j: (0, j)),  # weights resident
            ],
            out_specs=pl.BlockSpec((tn, S_out, To), lambda i, j: (i, 0, j)),
        ),
        compiler_params=pltpu.CompilerParams(
            dimension_semantics=("parallel", "parallel"),
            vmem_limit_bytes=vmem_limit,
        ),
        interpret=interpret,
    )(x_p, w_2d)
    return out[:, :S, :O]


def _reference(x, weight):
    """Pure-JAX reference of the PyTorch CNN.forward (inference), with inputs
    rounded to bf16 to match the kernel's input precision (f32 accumulation)."""
    O, W, D = weight.shape
    pad = (W - 1) // 2
    N, S, _ = x.shape
    xb = x.astype(jnp.bfloat16).astype(jnp.float32)
    wb = weight.astype(jnp.bfloat16).astype(jnp.float32)
    xp = jnp.pad(xb, ((0, 0), (pad, pad), (0, 0)))
    out = jnp.zeros((N, S, O), jnp.float32)
    for w in range(W):
        out = out + jnp.einsum("nsd,od->nso", xp[:, w:w + S, :], wb[:, w, :])
    return jnp.tanh(out)


if __name__ == "__main__":
    key = jax.random.PRNGKey(0)
    kx, kw = jax.random.split(key)

    # Small demo shapes: num_items x max_subitem_size x input_size, window 3.
    # S and O are deliberately NOT multiples of 8 / 128 to exercise the
    # wrapper-side padding + post-slice paths.
    N, S, D = 20, 13, 32
    W, O = 3, 100

    x = jax.random.normal(kx, (N, S, D), dtype=jnp.float32)
    # Xavier-uniform init of the Conv2d(1, O, (W, D)) weight (bias=False).
    limit = (6.0 / (W * D + O * W * D)) ** 0.5
    weight = jax.random.uniform(kw, (O, W, D), minval=-limit, maxval=limit,
                                dtype=jnp.float32)
    x_mask = jnp.ones((N, S), dtype=jnp.float32)   # unused by CNN.forward

    out = cnn_forward(x, weight, x_mask)           # auto tile heuristic
    out = jax.block_until_ready(out)

    ref = _reference(x, weight)
    assert out.shape == (N, S, O)
    # Kernel (bf16-in, f32-accumulate MXU) vs bf16-rounded f32 XLA reference.
    assert jnp.allclose(out, ref, atol=5e-3, rtol=5e-3), "mismatch vs reference"

    print("KERNEL_OK")
</pallas_src>

<mosaic_0001>
module attributes {stable_mosaic.version = 11 : i64} {
  func.func @_cnn_kernel(%arg0: i32, %arg1: i32, %arg2: memref<3x18x32xbf16, #tpu.memory_space<vmem>>, %arg3: memref<96x128xbf16, #tpu.memory_space<vmem>>, %arg4: memref<3x16x128xf32, #tpu.memory_space<vmem>>) attributes {dimension_semantics = [#tpu.dimension_semantics<parallel>, #tpu.dimension_semantics<parallel>], iteration_bounds = array<i64: 7, 1>, scalar_prefetch = 0 : i64, scratch_operands = 0 : i64, tpu.core_type = #tpu.core_type<tc>, window_params = [{transform_indices = @transform_0, window_bounds = array<i64: 3, 18, 32>}, {transform_indices = @transform_1, window_bounds = array<i64: 96, 128>}, {transform_indices = @transform_2, window_bounds = array<i64: 3, 16, 128>}]} {
    %c0 = arith.constant 0 : index
    %c0_0 = arith.constant 0 : index
    %c0_1 = arith.constant 0 : index
    %0 = vector.load %arg2[%c0, %c0_0, %c0_1] : memref<3x18x32xbf16, #tpu.memory_space<vmem>>, vector<3x16x32xbf16>
    %c0_2 = arith.constant 0 : index
    %c1 = arith.constant 1 : index
    %c0_3 = arith.constant 0 : index
    %1 = vector.load %arg2[%c0_2, %c1, %c0_3] : memref<3x18x32xbf16, #tpu.memory_space<vmem>>, vector<3x16x32xbf16>
    %c0_4 = arith.constant 0 : index
    %c2 = arith.constant 2 : index
    %c0_5 = arith.constant 0 : index
    %2 = vector.load %arg2[%c0_4, %c2, %c0_5] : memref<3x18x32xbf16, #tpu.memory_space<vmem>>, vector<3x16x32xbf16>
    %3 = tpu.concatenate %0, %1, %2 in 2 : vector<3x16x32xbf16>, vector<3x16x32xbf16>, vector<3x16x32xbf16> -> vector<3x16x96xbf16>
    %4 = vector.shape_cast %3 : vector<3x16x96xbf16> to vector<48x96xbf16>
    %c0_6 = arith.constant 0 : index
    %c0_7 = arith.constant 0 : index
    %5 = vector.load %arg3[%c0_6, %c0_7] : memref<96x128xbf16, #tpu.memory_space<vmem>>, vector<96x128xbf16>
    %cst = arith.constant dense<0.000000e+00> : vector<48x128xf32>
    %6 = tpu.matmul %4, %5, %cst {dimension_numbers = #tpu.dot_dimension_numbers<[1], [0], [0], [1], [0, 0, 1, 1], [], []>} : vector<48x96xbf16>, vector<96x128xbf16>, vector<48x128xf32> -> vector<48x128xf32>
    %7 = math.tanh %6 : vector<48x128xf32>
    %8 = vector.shape_cast %7 : vector<48x128xf32> to vector<3x16x128xf32>
    %c0_8 = arith.constant 0 : index
    %c0_9 = arith.constant 0 : index
    %c0_10 = arith.constant 0 : index
    %9 = vector.load %arg4[%c0_8, %c0_9, %c0_10] : memref<3x16x128xf32, #tpu.memory_space<vmem>>, vector<3x16x128xf32>
    tpu.vector_store %arg4[%c0_8, %c0_9, %c0_10], %8 {strides = array<i32>} : memref<3x16x128xf32, #tpu.memory_space<vmem>>, vector<3x16x128xf32>,
    return
  }
  func.func @transform_0(%arg0: i32, %arg1: i32) -> (i32, i32, i32) {
    %c0_i32 = arith.constant 0 : i32
    %c0_i32_0 = arith.constant 0 : i32
    %c0_i32_1 = arith.constant 0 : i32
    return %arg0, %c0_i32, %c0_i32_0 : i32, i32, i32
  }
  func.func @transform_1(%arg0: i32, %arg1: i32) -> (i32, i32) {
    %c0_i32 = arith.constant 0 : i32
    %c0_i32_0 = arith.constant 0 : i32
    return %c0_i32, %arg1 : i32, i32
  }
  func.func @transform_2(%arg0: i32, %arg1: i32) -> (i32, i32, i32) {
    %c0_i32 = arith.constant 0 : i32
    %c0_i32_0 = arith.constant 0 : i32
    return %arg0, %c0_i32, %arg1 : i32, i32, i32
  }
}

</mosaic_0001>

<llo_original>
// kernel: tpu_custom_call.1
$region0: #{tpu_custom_call.1}
  #allocation0 [shape = 'u32[]', space=smem, size = 0x4, offset = 0x4, fixed_abs, tag = 'smem constant byte address 0x4 - core index']
  #allocation1 [shape = 'u32[72,128]{1,0:T(1,128)}', space=vmem, size = 0x9000, scoped, tag = 'internal scratch']
  %s0 = inlined_call_operand.vmem [shape: bf16[20,18,32], index: 0, kind: input, shape index: {}]
  %s1 = inlined_call_operand.vmem [shape: bf16[96,128], index: 1, kind: input, shape index: {}]
  %s2 = inlined_call_operand.hbm [shape: f32[20,16,128], index: 2, kind: output, shape index: {}]
  %s3 = sld [smem:[#allocation0]]
  $region41: #{tpu_custom_call.1} parent=0
    _
  %s5 = ssub.s32 1, %s3
  %s6 = scalar_select 0, %s5, %s3
  $region1: #{tpu_custom_call.1} parent=0
    #allocation2 [shape = 'u8[49152]{0}', space=vmem, size = 0xc000, scoped, tag = 'output window, operand 0']
    #allocation3 [shape = 's32[2]{0}', space=sflag, size = 0x8, scoped, tag = 'scoped memory for tpu_custom_call.1']
    %7 = vsyncpa [#allocation3], 0
    %s8 = scalar_lea.sflag [#allocation3], 1
    %9 = vsyncpa %s8, 0
    loop: start=0, step=1, limit=9
    $region2: #{tpu_custom_call.1} parent=1 // loop_pre_header
      _
    $region3: #{tpu_custom_call.1} parent=1 // loop_header
      %s11 = sphi 0, %s15
      %p12 = scmp.ge.s32.totalorder %s11, 9
      %s18 = sphi 0, %s30
      %s19 = sphi 0, %s26
      %s20 = sphi 0, %s18
      %s21 = sphi 0, %s19
      %s22 = sphi 0, %s20
      %s23 = sphi 0, %s21
      %s33 = sphi 0, %s35
      %s36 = sphi 0, %s33
      %s37 = sphi 0, %s36
      %s53 = sphi 0, %s37
      %s59 = sphi 0, %s61
      %s62 = sphi 0, %s59
      %s63 = sphi 0, %s62
      %s79 = sphi 0, %s63
      %s87 = sphi 0, %s89
      %s90 = sphi 0, %s87
      %s91 = sphi 0, %s90
      %s107 = sphi 0, %s91
    $region4: #{tpu_custom_call.1} parent=1 // loop_header_branch
      %14 = sbr.rel (%p12) target = $region8
    $region5: #{tpu_custom_call.1} parent=1 // loop_body
      %s16 = ssub.s32 %s11, 1
      %s17 = ssub.s32 %s11, 2
      %s24 = sadd.s32 1, %s19
      %p25 = scmp.ge.s32.totalorder %s24, 1
      %s26 = scalar_select %p25, 0, %s24
      %s27 = sadd.s32 1, %s18
      %s28 = scalar_select %p25, %s27, %s18
      %p29 = scmp.ge.s32.totalorder %s28, 7
      %s30 = scalar_select %p29, 0, %s28
      %s31 = ssub.s32 %s18, %s30
      %p32 = scmp.eq.s32.totalorder %s31, 0
      %s34 = sadd.s32 %s33, 1
      %s35 = scalar_select %p32, %s33, %s34
      %p38 = pneg %p32
      %p39 = scmp.eq.s32.totalorder %s11, 6
      %p40 = por %p38, %p39
      %p41 = scmp.ne.s32.totalorder %s33, %s36
      %p42 = scmp.eq.s32.totalorder %s11, 0
      %p43 = por %p41, %p42
      %p44 = scmp.ne.s32.totalorder %s33, %s36
      %p45 = scmp.eq.s32.totalorder %s16, 6
      %p46 = por %p44, %p45
      %p47 = scmp.ne.s32.totalorder %s36, %s37
      %p48 = scmp.eq.s32.totalorder %s16, 0
      %p49 = por %p47, %p48
      %p50 = scmp.ne.s32.totalorder %s36, %s37
      %p51 = scmp.eq.s32.totalorder %s17, 6
      %p52 = por %p50, %p51
      %p54 = scmp.ne.s32.totalorder %s37, %s53
      %p55 = scmp.eq.s32.totalorder %s17, 0
      %p56 = por %p54, %p55
      %s57 = ssub.s32 %s19, %s26
      %p58 = scmp.eq.s32.totalorder %s57, 0
      %s60 = sadd.s32 %s59, 1
      %s61 = scalar_select %p58, %s59, %s60
      %p64 = pneg %p58
      %p65 = scmp.eq.s32.totalorder %s11, 6
      %p66 = por %p64, %p65
      %p67 = scmp.ne.s32.totalorder %s59, %s62
      %p68 = scmp.eq.s32.totalorder %s11, 0
      %p69 = por %p67, %p68
      %p70 = scmp.ne.s32.totalorder %s59, %s62
      %p71 = scmp.eq.s32.totalorder %s16, 6
      %p72 = por %p70, %p71
      %p73 = scmp.ne.s32.totalorder %s62, %s63
      %p74 = scmp.eq.s32.totalorder %s16, 0
      %p75 = por %p73, %p74
      %p76 = scmp.ne.s32.totalorder %s62, %s63
      %p77 = scmp.eq.s32.totalorder %s17, 6
      %p78 = por %p76, %p77
      %p80 = scmp.ne.s32.totalorder %s63, %s79
      %p81 = scmp.eq.s32.totalorder %s17, 0
      %p82 = por %p80, %p81
      %s83 = ssub.s32 %s18, %s30
      %s84 = ssub.s32 %s19, %s26
      %s85 = sor.u32 %s83, %s84
      %p86 = scmp.eq.s32.totalorder %s85, 0
      %s88 = sadd.s32 %s87, 1
      %s89 = scalar_select %p86, %s87, %s88
      %p92 = pneg %p86
      %p93 = scmp.eq.s32.totalorder %s11, 6
      %p94 = por %p92, %p93
      %p95 = scmp.ne.s32.totalorder %s87, %s90
      %p96 = scmp.eq.s32.totalorder %s11, 0
      %p97 = por %p95, %p96
      %p98 = scmp.ne.s32.totalorder %s87, %s90
      %p99 = scmp.eq.s32.totalorder %s16, 6
      %p100 = por %p98, %p99
      %p101 = scmp.ne.s32.totalorder %s90, %s91
      %p102 = scmp.eq.s32.totalorder %s16, 0
      %p103 = por %p101, %p102
      %p104 = scmp.ne.s32.totalorder %s90, %s91
      %p105 = scmp.eq.s32.totalorder %s17, 6
      %p106 = por %p104, %p105
      %p108 = scmp.ne.s32.totalorder %s91, %s107
      %p109 = scmp.eq.s32.totalorder %s17, 0
      %p110 = por %p108, %p109
      %p111 = scmp.le.s32.totalorder 1, %s11
      %p112 = scmp.lt.s32.totalorder %s11, 8
      %p113 = pnand %p111, %p112
      %p114 = pneg %p113
      // Predicated region
      $region9: #{tpu_custom_call.1} parent=5 // pred_check
        _
      $region10: #{tpu_custom_call.1} parent=5 // pred_check_branch
        %116 = sbr.rel (%p113) target = $region12
      $region11: #{tpu_custom_call.1} parent=5 // pred_region
        %s117 = ssub.s32 %s11, 1
        // Predicated region
        $region13: #{tpu_custom_call.1} parent=11 // pred_check
          %p118 = pneg %p75
        $region14: #{tpu_custom_call.1} parent=11 // pred_check_branch
          %120 = sbr.rel (%p118) target = $region16
        $region15: #{tpu_custom_call.1} parent=11 // pred_region
          %p121 = scmp.lt.s32.totalorder %s21, 0
          %s122 = scalar_select %p121, %s21, 0
          %s123 = smul.addr %s122, 4
          %s124 = scalar_lea.vmem %s1, %s123
        $region16: #{tpu_custom_call.1} parent=11 // pred_fallthru
          _
      $region12: #{tpu_custom_call.1} parent=5 // pred_fallthru
        _
      %p125 = scmp.lt.s32.totalorder %s11, 7
      // Predicated region
      $region17: #{tpu_custom_call.1} parent=5 // pred_check
        %p126 = pneg %p125
      $region18: #{tpu_custom_call.1} parent=5 // pred_check_branch
        %128 = sbr.rel (%p126) target = $region20
      $region19: #{tpu_custom_call.1} parent=5 // pred_region
        // Predicated region
        $region21: #{tpu_custom_call.1} parent=19 // pred_check
          %p129 = pneg %p43
        $region22: #{tpu_custom_call.1} parent=19 // pred_check_branch
          %131 = sbr.rel (%p129) target = $region24
        $region23: #{tpu_custom_call.1} parent=19 // pred_region
          %s132 = smul.u32 3, %s18
          %s133 = ssub.s32 20, %s132
          %p134 = scmp.lt.s32.totalorder %s133, 3
          %s135 = scalar_select %p134, %s133, 3
          %s136 = smul.u32 4, %s135
          %s137 = smul.u32 %s136, 3
          %p138 = scmp.lt.s32.totalorder %s132, 19
          %s139 = scalar_select %p138, %s132, 19
          %s140 = smul.addr %s139, 3
          %s141 = smul.addr %s140, 4
          %s142 = scalar_lea.vmem %s0, %s141
          %s143 = smul.u32 3, %s18
          %s144 = ssub.s32 20, %s143
          %p145 = scmp.lt.s32.totalorder %s144, 3
          %s146 = scalar_select %p145, %s144, 3
          %s147 = smul.u32 4, %s146
          %s148 = smul.u32 %s147, 3
        $region24: #{tpu_custom_call.1} parent=19 // pred_fallthru
          _
      $region20: #{tpu_custom_call.1} parent=5 // pred_fallthru
        _
      %p149 = scmp.le.s32.totalorder 1, %s11
      %p150 = scmp.lt.s32.totalorder %s11, 8
      %p151 = pnand %p149, %p150
      %p152 = pneg %p151
      // Predicated region
      $region25: #{tpu_custom_call.1} parent=5 // pred_check
        _
      $region26: #{tpu_custom_call.1} parent=5 // pred_check_branch
        %154 = sbr.rel (%p151) target = $region28
      $region27: #{tpu_custom_call.1} parent=5 // pred_region
        %s155 = ssub.s32 %s11, 1
        %s156 = smul.u32 3, %s20
        %s157 = ssub.s32 20, %s156
        %p158 = scmp.lt.s32.totalorder %s157, 3
        %s159 = scalar_select %p158, %s157, 3
        %s160 = smul.u32 4, %s159
        %s161 = smul.u32 %s160, 3
        %p162 = scmp.lt.s32.totalorder %s156, 19
        %s163 = scalar_select %p162, %s156, 19
        %s164 = smul.addr %s163, 3
        %s165 = smul.addr %s164, 4
        %s166 = scalar_lea.vmem %s0, %s165
        %p167 = pneg %p49
        %p168 = pneg %p46
        %p169 = scmp.lt.s32.totalorder %s21, 0
        %s170 = scalar_select %p169, %s21, 0
        %s171 = smul.addr %s170, 4
        %s172 = scalar_lea.vmem %s1, %s171
        %p173 = pneg %p75
        %p174 = pneg %p72
        %p175 = pneg %p103
        %p176 = pneg %p100
        %s177 = sand.u32 %s90, 1
        %s178 = scalar_lea.sflag [#allocation3], %s177
        %s179 = sand.u32 %s90, 1
        %s180 = smul.addr %s179, 48
        %s181 = scalar_lea.vmem [#allocation2], %s180
        %s182 = smul.u32 3, %s20
        %s183 = ssub.s32 20, %s182
        %p184 = scmp.lt.s32.totalorder %s183, 3
        %s185 = scalar_select %p184, %s183, 3
        %s186 = smul.u32 4, %s185
        %s187 = smul.u32 %s186, 3
        %p188 = scmp.lt.s32.totalorder %s182, 19
        %s189 = scalar_select %p188, %s182, 19
        %s190 = smul.addr %s189, 3
        %s191 = smul.addr %s190, 4
        %s192 = scalar_lea.vmem %s0, %s191
        %s193 = smul.u32 3, %s20
        %s194 = ssub.s32 20, %s193
        %p195 = scmp.lt.s32.totalorder %s194, 3
        %s196 = scalar_select %p195, %s194, 3
        %s197 = smul.u32 4, %s196
        %s198 = smul.u32 %s197, 3
        %p199 = scmp.lt.s32.totalorder %s21, 0
        %s200 = scalar_select %p199, %s21, 0
        %s201 = smul.addr %s200, 4
        %s202 = scalar_lea.vmem %s1, %s201
        %s203 = smul.u32 3, %s20
        %s204 = ssub.s32 20, %s203
        %p205 = scmp.lt.s32.totalorder %s204, 3
        %s206 = scalar_select %p205, %s204, 3
        %s207 = smul.u32 8, %s206
        %s208 = smul.u32 %s207, 2
        %v210 = vld [vmem:[%s192] sm:$0xf]
        %v211 = vld [vmem:[%s192 + $0x4] sm:$0xf]
        %v212 = vld [vmem:[%s192 + $0xc] sm:$0xf]
        %v213 = vld [vmem:[%s192 + $0x10] sm:$0xf]
        %v214 = vld [vmem:[%s192 + $0x18] sm:$0xf]
        %v215 = vld [vmem:[%s192 + $0x1c] sm:$0xf]
        %v216 = vld [vmem:[%s192 + $0x8] sm:$0x1]
        %v217 = vld [vmem:[%s192 + $0x14] sm:$0x1]
        %v218 = vld [vmem:[%s192 + $0x20] sm:$0x1]
        %v219 = vld [vmem:[%s192] sm:$0xe]
        %v220 = vld [vmem:[%s192 + $0xc] sm:$0xe]
        %v221 = vld [vmem:[%s192 + $0x18] sm:$0xe]
        %v228 = vunpack.c.l.b16 %v210
        %v229 = vunpack.c.l.b16 %v211
        %v230 = vunpack.c.l.b16 %v212
        %v231 = vunpack.c.l.b16 %v213
        %v232 = vunpack.c.l.b16 %v214
        %v233 = vunpack.c.l.b16 %v215
        %v234 = vpack.c.b16 %v229, %v228
        %v235 = vpack.c.b16 %v231, %v230
        %v236 = vpack.c.b16 %v233, %v232
        %v240 = vunpack.c.l.b16 %v216
        %v241 = vunpack.c.l.b16 %v217
        %v242 = vunpack.c.l.b16 %v218
        %v243 = vpack.c.b16 %v240, %v240
        %v244 = vpack.c.b16 %v241, %v241
        %v245 = vpack.c.b16 %v242, %v242
        %vm246 = vsmask.f32 7424
        %v248 = vshrl.u32 %v234, 16
        %v250 = vshll.u32 %v234, 16
        %v252 = vrot.slane %v250, 1
        %v253 = vor.u32 %v248, %v252
        %v255 = vshll.u32 %v243, 16
        %v257 = vrot.slane %v255, 1
        %v258 = vsel %vm246, %v253, %v257
        %v260 = vshrl.u32 %v235, 16
        %v262 = vshll.u32 %v235, 16
        %v264 = vrot.slane %v262, 1
        %v265 = vor.u32 %v260, %v264
        %v267 = vshll.u32 %v244, 16
        %v269 = vrot.slane %v267, 1
        %v270 = vsel %vm246, %v265, %v269
        %v272 = vshrl.u32 %v236, 16
        %v274 = vshll.u32 %v236, 16
        %v276 = vrot.slane %v274, 1
        %v277 = vor.u32 %v272, %v276
        %v279 = vshll.u32 %v245, 16
        %v281 = vrot.slane %v279, 1
        %v282 = vsel %vm246, %v277, %v281
        %283 = vrot.lane.b32.xlu0 %v258, 32
        %v284 = vpop.permute.xlu0 %283
        %285 = vrot.lane.b32.xlu0 %v270, 32
        %v286 = vpop.permute.xlu0 %285
        %287 = vrot.lane.b32.xlu0 %v282, 32
        %v288 = vpop.permute.xlu0 %287
        %v292 = vunpack.c.l.b16 %v219
        %v293 = vunpack.c.l.b16 %v220
        %v294 = vunpack.c.l.b16 %v221
        %v295 = vpack.c.b16 %v229, %v292
        %v296 = vpack.c.b16 %v231, %v293
        %v297 = vpack.c.b16 %v233, %v294
        %vm298 = vcmask 1046528
        %v299 = vrot.slane %v295, 1
        %v300 = vrot.slane %v243, 1
        %v301 = vsel %vm298, %v299, %v300
        %v302 = vrot.slane %v296, 1
        %v303 = vrot.slane %v244, 1
        %v304 = vsel %vm298, %v302, %v303
        %v305 = vrot.slane %v297, 1
        %v306 = vrot.slane %v245, 1
        %v307 = vsel %vm298, %v305, %v306
        %308 = vrot.lane.b32.xlu0 %v301, 64
        %v309 = vpop.permute.xlu0 %308
        %310 = vrot.lane.b32.xlu0 %v304, 64
        %v311 = vpop.permute.xlu0 %310
        %312 = vrot.lane.b32.xlu0 %v307, 64
        %v313 = vpop.permute.xlu0 %312
        %vm314 = vcmask 261120
        %v316 = vsel %vm314, %v234, %v284
        %v318 = vsel %vm314, %v235, %v286
        %v320 = vsel %vm314, %v236, %v288
        %vm321 = vcmask 523264
        %v323 = vsel %vm321, %v316, %v309
        %v325 = vsel %vm321, %v318, %v311
        %v327 = vsel %vm321, %v320, %v313
        %v328 = vld [vmem:[%s202] sm:$0xf]
        %v329 = vld [vmem:[%s202 + $0x4] sm:$0xf]
        %v330 = vld [vmem:[%s202 + $0x8] sm:$0xf]
        %v331 = vld [vmem:[%s202 + $0xc] sm:$0xf]
        %v332 = vld [vmem:[%s202 + $0x10] sm:$0xf]
        %v333 = vld [vmem:[%s202 + $0x14] sm:$0xf]
        %v334 = vld [vmem:[%s202 + $0x18] sm:$0xf]
        %v335 = vld [vmem:[%s202 + $0x1c] sm:$0xf]
        %v336 = vld [vmem:[%s202 + $0x20] sm:$0xf]
        %v337 = vld [vmem:[%s202 + $0x24] sm:$0xf]
        %v338 = vld [vmem:[%s202 + $0x28] sm:$0xf]
        %v339 = vld [vmem:[%s202 + $0x2c] sm:$0xf]
        %v352 = vunpack.c.l.b16 %v328
        %v353 = vunpack.c.l.b16 %v329
        %v354 = vunpack.c.l.b16 %v330
        %v355 = vunpack.c.l.b16 %v331
        %v356 = vunpack.c.l.b16 %v332
        %v357 = vunpack.c.l.b16 %v333
        %v358 = vunpack.c.l.b16 %v334
        %v359 = vunpack.c.l.b16 %v335
        %v360 = vunpack.c.l.b16 %v336
        %v361 = vunpack.c.l.b16 %v337
        %v362 = vunpack.c.l.b16 %v338
        %v363 = vunpack.c.l.b16 %v339
        %v364 = vpack.c.b16 %v353, %v352
        %v365 = vpack.c.b16 %v355, %v354
        %v366 = vpack.c.b16 %v357, %v356
        %v367 = vpack.c.b16 %v359, %v358
        %v368 = vpack.c.b16 %v361, %v360
        %v369 = vpack.c.b16 %v363, %v362
        %vm376 = vcmask 785408
        %v377 = vsel %vm376, %v323, 0
        %v379 = vsel %vm376, %v325, 0
        %v381 = vsel %vm376, %v327, 0
        %383 = vmatpush.bf16.msra.mxu0 0
        %384 = vmatpush.bf16.msra.mxu0 0
        %385 = vmatpush.bf16.msra.mxu0 %v369
        %386 = vmatpush.bf16.msra.mxu0 %v368
        %387 = vmatpush.bf16.msra.mxu0 %v367
        %388 = vmatpush.bf16.msra.mxu0 %v366
        %389 = vmatpush.bf16.msra.mxu0 %v365
        %390 = vmatpush.bf16.msra.mxu0 %v364
        %391 = vmatmul.bf16.gmra.mxu0 %v377
        %v392 = vpop.f32.mrf.mxu0
        %v393 = vadd.f32 0.0, %v392
        %v394 = vpop.f32.mrf.mxu0
        %v395 = vadd.f32 0.0, %v394
        %396 = vmatmul.bf16.gmra.mxu0 %v379
        %v397 = vpop.f32.mrf.mxu0
        %v398 = vadd.f32 0.0, %v397
        %v399 = vpop.f32.mrf.mxu0
        %v400 = vadd.f32 0.0, %v399
        %401 = vmatmul.bf16.gmra.mxu0 %v381
        %v402 = vpop.f32.mrf.mxu0
        %v403 = vadd.f32 0.0, %v402
        %v404 = vpop.f32.mrf.mxu0
        %v405 = vadd.f32 0.0, %v404
        %406 = vdwg.mxu0
        %v407 = vtanh.pop %v393
        %v408 = vtanh.pop %v395
        %v409 = vtanh.pop %v398
        %v410 = vtanh.pop %v400
        %v411 = vtanh.pop %v403
        %v412 = vtanh.pop %v405
        %413 = vst [vmem:[%s181] sm:$0xff] %v407
        %414 = vst [vmem:[%s181 + $0x8] sm:$0xff] %v408
        %415 = vst [vmem:[%s181 + $0x10] sm:$0xff] %v409
        %416 = vst [vmem:[%s181 + $0x18] sm:$0xff] %v410
        %417 = vst [vmem:[%s181 + $0x20] sm:$0xff] %v411
        %418 = vst [vmem:[%s181 + $0x28] sm:$0xff] %v412
        %s419 = sand.u32 %s90, 1
        %s420 = scalar_lea.sflag [#allocation3], %s419
        %s421 = sand.u32 %s90, 1
        %s422 = smul.addr %s421, 48
        %s423 = scalar_lea.vmem [#allocation2], %s422
        // Predicated region
        $region29: #{tpu_custom_call.1} parent=27 // pred_check
          %p424 = pneg %p100
        $region30: #{tpu_custom_call.1} parent=27 // pred_check_branch
          %426 = sbr.rel (%p424) target = $region32
        $region31: #{tpu_custom_call.1} parent=27 // pred_region
          %s427 = smul.u32 3, %s20
          %s428 = ssub.s32 20, %s427
          %p429 = scmp.lt.s32.totalorder %s428, 3
          %s430 = scalar_select %p429, %s428, 3
          %s431 = smul.u32 8, %s430
          %s432 = smul.u32 %s431, 2
          %s433 = ssub.s32 48, %s432
          %s434 = sshll.u32 %s433, 4
          %435 = vsyncadd %s420, %s434
          %p436 = scmp.ne.s32.totalorder 0, %s432
          %s437 = smul.addr %s427, 2
          %s438 = sadd.s32 %s21, %s437
          %s439 = smul.addr %s438, 8
          %s440 = scalar_lea.hbm %s2, %s439
          %s441 = smul.u32 %s430, 2
          %s442 = smul.u32 8, %s441
          %s443 = sshll.u32 %s423, 4
          %s444 = int_to_ptr.vmem [resolvable:$true] %s443
          %s445 = sshll.u32 %s440, 4
          %s446 = int_to_ptr.hbm [resolvable:$true] %s445
          %s447 = sshll.u32 %s442, 4
          %451 = dma.vmem_to_hbm [thread:$0]  (%p436), %s444, %s447, %s446, %s420, 128, 128, 8
        $region32: #{tpu_custom_call.1} parent=27 // pred_fallthru
          _
      $region28: #{tpu_custom_call.1} parent=5 // pred_fallthru
        _
      %p452 = scmp.le.s32.totalorder 2, %s11
      // Predicated region
      $region33: #{tpu_custom_call.1} parent=5 // pred_check
        %p453 = pneg %p452
      $region34: #{tpu_custom_call.1} parent=5 // pred_check_branch
        %455 = sbr.rel (%p453) target = $region36
      $region35: #{tpu_custom_call.1} parent=5 // pred_region
        %s456 = ssub.s32 %s11, 2
        // Predicated region
        $region37: #{tpu_custom_call.1} parent=35 // pred_check
          %p457 = pneg %p106
        $region38: #{tpu_custom_call.1} parent=35 // pred_check_branch
          %459 = sbr.rel (%p457) target = $region40
        $region39: #{tpu_custom_call.1} parent=35 // pred_region
          %s460 = sand.u32 %s91, 1
          %s461 = scalar_lea.sflag [#allocation3], %s460
          %s462 = sand.u32 %s91, 1
          %s463 = smul.addr %s462, 48
          %s464 = scalar_lea.vmem [#allocation2], %s463
          %466 = dma.done %s461, 768
        $region40: #{tpu_custom_call.1} parent=35 // pred_fallthru
          _
      $region36: #{tpu_custom_call.1} parent=5 // pred_fallthru
        _
    $region6: #{tpu_custom_call.1} parent=1 // loop_footer
      %s15 = sadd.s32 1, %s11
    $region7: #{tpu_custom_call.1} parent=1 // loop_footer_branch
      %10 = sbr.rel target = $region3
    $region8: #{tpu_custom_call.1} parent=1 // loop_exit
      _
    %467 = vsyncpa [#allocation3], 1
    %s468 = scalar_lea.sflag [#allocation3], 1
    %469 = vsyncpa %s468, 1

</llo_original>
